<compile_context>
chip_gen: v7x
topology: tpu7x:2x2x1
jax: 0.10.0
libtpu: 0.0.40
codegen_flags: <defaults>
</compile_context>

<pallas_src>
import functools

import jax
import jax.numpy as jnp
from jax.experimental import pallas as pl
from jax.experimental.pallas import tpu as pltpu


def _round_up(x: int, m: int) -> int:
    return ((x + m - 1) // m) * m


def _pick_tile(total: int, target: int, align: int):
    """Largest multiple of `align` that divides `total` and is <= target, else None."""
    if total % align == 0 and total <= target:
        return total
    t = min((target // align) * align, (total // align) * align)
    while t >= align:
        if total % t == 0:
            return t
        t -= align
    return None


def _chip_config():
    """Per-generation targets: (tm_target, tf_target, vmem_cap_bytes, want_two_token_tiles)."""
    vmem = None
    try:
        info = pltpu.get_tpu_info()
        vmem = getattr(info, "vmem_capacity_bytes", None)
    except Exception:
        vmem = None
    if vmem is None:
        # Unknown chip: conservative settings that fit every generation.
        return 384, 256, 48 << 20, True
    if vmem <= (96 << 20):
        # v7x-class: 64 MiB VMEM per TensorCore, 2 TCs/chip -> smaller tf,
        # keep >=2 token tiles so both cores are engaged.
        return 512, 256, int(min(vmem - (8 << 20), 56 << 20)), True
    # v5e / v6e: 128 MiB VMEM, single TC.  tm~768 clears the v6e roofline.
    return 768, 512, int(min(vmem - (16 << 20), 112 << 20)), False


def _choose_tm(T: int, tm_target: int, want_two_tiles: bool) -> int:
    """Token tile: multiple of 16 (bf16 sublanes), preferably 256 (MXU rows)."""
    t16 = _round_up(T, 16)
    tm = min(_round_up(tm_target, 16), t16)
    if tm > 256:
        tm = max(256, (tm // 256) * 256)          # full MXU-row granularity
    if want_two_tiles and t16 >= 512:
        # Cap tm so the 'parallel' token axis has >=2 tiles (v7x: 2 TCs).
        tm = min(tm, max(256, _round_up((t16 + 1) // 2, 256)))
    return max(tm, 16)


def _vmem_bytes_estimate(tm: int, tf: int, H: int) -> int:
    """Rough VMEM budget: double-buffered operands + scratch + f32 temporaries."""
    bf16, f32 = 2, 4
    bufs = 2 * (tm * H * bf16            # x tile
                + H * (2 * tf) * bf16    # fused W1|W3 tile
                + tf * H * bf16          # W2.T tile
                + tm * H * bf16)         # output tile
    scratch = tm * H * f32               # accumulator
    temps = (tm * (2 * tf) * f32         # h = x @ [W1.T|W3.T]
             + 2 * tm * tf * f32         # gated (+ live sibling)
             + tm * tf * bf16            # bf16 cast of gated
             + tm * H * f32)             # acc read-modify-write temp
    return bufs + scratch + temps


def _mixtral_mlp_kernel(x_ref, w13_ref, w2_ref, o_ref, acc_ref, *, tf):
    # x_ref  : (tm, H)       bf16  token tile (resident across the F axis)
    # w13_ref: (1, H, 2*tf)  bf16  [W1.T | W3.T] tile, canonical (K, N) layout
    # w2_ref : (1, tf, H)    bf16  W2.T tile, canonical (K, N) layout
    # o_ref  : (tm, H)             output token tile
    # acc_ref: (tm, H)       f32   accumulator over F tiles
    f_idx = pl.program_id(1)

    @pl.when(f_idx == 0)
    def _():
        acc_ref[...] = jnp.zeros_like(acc_ref)

    x = x_ref[...]
    # Single long MXU pass producing both projections: (tm, 2*tf) in f32.
    h = jnp.dot(x, w13_ref[0], preferred_element_type=jnp.float32)
    h1 = h[:, :tf]
    h3 = h[:, tf:]
    # SiLU(h1) * h3 in f32 (VPU + EUP).  Deliberate bf16 downcast before the
    # second matmul (standard bf16 MLP practice).
    gated = (h1 * jax.nn.sigmoid(h1)) * h3

    acc_ref[...] += jnp.dot(gated.astype(w2_ref.dtype), w2_ref[0],
                            preferred_element_type=jnp.float32)

    @pl.when(f_idx == pl.num_programs(1) - 1)
    def _():
        o_ref[...] = acc_ref[...].astype(o_ref.dtype)


@functools.partial(jax.jit, static_argnames=("tm", "tf", "compute_dtype",
                                             "vmem_limit_bytes"))
def mixtral_mlp(hidden_states, w1, w2, w3, *, tm=None, tf=None,
                compute_dtype=jnp.bfloat16, vmem_limit_bytes=None):
    """MixtralMLP forward.

    hidden_states: (T, H)
    w1, w3       : (F, H)   (ReplicatedLinear (out_features, in_features))
    w2           : (H, F)
    returns      : (T, H) in hidden_states.dtype
    """
    T, H = hidden_states.shape
    F_dim, H1 = w1.shape
    assert H1 == H and w2.shape == (H, F_dim) and w3.shape == (F_dim, H)
    out_dtype = hidden_states.dtype

    chip_tm, chip_tf, vmem_cap, want_two_tiles = _chip_config()
    tm_target = tm if tm is not None else chip_tm
    tf_target = tf if tf is not None else chip_tf

    # ---- tile selection -----------------------------------------------------
    tm_eff = _choose_tm(T, tm_target, want_two_tiles)
    tf_target = max(128, _round_up(tf_target, 128))
    tf_eff = _pick_tile(F_dim, tf_target, 128)
    if tf_eff is None:
        # No aligned divisor: pick an aligned tf and zero-pad F up to it.
        tf_eff = min(tf_target, _round_up(F_dim, 128))
    F_pad = _round_up(F_dim, tf_eff)
    T_pad = _round_up(T, tm_eff)
    nF = F_pad // tf_eff

    # ---- operands (casts are no-ops when weights already stored in bf16) ----
    x = hidden_states.astype(compute_dtype)
    w1c = w1.astype(compute_dtype)
    w2c = w2.astype(compute_dtype)
    w3c = w3.astype(compute_dtype)

    if T_pad != T:
        x = jnp.pad(x, ((0, T_pad - T), (0, 0)))
    if F_pad != F_dim:
        # Zero-padded FFN rows/cols contribute exactly zero to the output.
        w1c = jnp.pad(w1c, ((0, F_pad - F_dim), (0, 0)))
        w3c = jnp.pad(w3c, ((0, F_pad - F_dim), (0, 0)))
        w2c = jnp.pad(w2c, ((0, 0), (0, F_pad - F_dim)))

    # One-time weight layout prep (cache this at weight-load time in prod):
    #   w13[j] = [W1_tile_j.T | W3_tile_j.T] : (H, 2*tf)  canonical RHS
    #   w2t[j] = W2_tile_j.T                 : (tf, H)    canonical RHS
    w13 = jnp.concatenate(
        [w1c.T.reshape(H, nF, tf_eff).transpose(1, 0, 2),
         w3c.T.reshape(H, nF, tf_eff).transpose(1, 0, 2)], axis=2)
    w2t = w2c.T.reshape(nF, tf_eff, H)

    grid = (T_pad // tm_eff, nF)

    if vmem_limit_bytes is None:
        need = _vmem_bytes_estimate(tm_eff, tf_eff, H) + (6 << 20)
        vmem_limit_bytes = int(min(max(need, 32 << 20), vmem_cap))

    cost = pl.CostEstimate(
        flops=6 * T_pad * F_pad * H,                    # three (T,F,H) matmuls
        transcendentals=T_pad * F_pad,                  # sigmoid in SiLU
        bytes_accessed=(grid[0] * 3 * F_pad * H * 2     # weights streamed/tile
                        + 2 * T_pad * H * 2),           # x read + out write
    )

    kernel = functools.partial(_mixtral_mlp_kernel, tf=tf_eff)

    out = pl.pallas_call(
        kernel,
        out_shape=jax.ShapeDtypeStruct((T_pad, H), out_dtype),
        grid_spec=pltpu.PrefetchScalarGridSpec(
            num_scalar_prefetch=0,
            grid=grid,
            in_specs=[
                pl.BlockSpec((tm_eff, H), lambda i, j: (i, 0)),            # x
                pl.BlockSpec((1, H, 2 * tf_eff), lambda i, j: (j, 0, 0)),  # W1|W3
                pl.BlockSpec((1, tf_eff, H), lambda i, j: (j, 0, 0)),      # W2.T
            ],
            out_specs=pl.BlockSpec((tm_eff, H), lambda i, j: (i, 0)),
            scratch_shapes=[pltpu.VMEM((tm_eff, H), jnp.float32)],
        ),
        compiler_params=pltpu.CompilerParams(
            dimension_semantics=("parallel", "arbitrary"),
            vmem_limit_bytes=vmem_limit_bytes,
        ),
        cost_estimate=cost,
    )(x, w13, w2t)

    return out[:T] if T_pad != T else out


def _ref_mixtral_mlp(x, w1, w2, w3):
    # f32 reference of the same math (operands already bf16-rounded).
    xf = x.astype(jnp.float32)
    w1f = w1.astype(jnp.float32)
    w2f = w2.astype(jnp.float32)
    w3f = w3.astype(jnp.float32)
    h1 = xf @ w1f.T
    h3 = xf @ w3f.T
    gated = (h1 * jax.nn.sigmoid(h1)) * h3
    return gated @ w2f.T


if __name__ == "__main__":
    # Small but tile-exercising shapes: ragged T (padding path), multiple
    # token tiles and multiple FFN tiles (accumulator path).
    T, H, F_dim = 200, 256, 512

    key = jax.random.PRNGKey(0)
    kx, k1, k2, k3 = jax.random.split(key, 4)

    x = jax.random.normal(kx, (T, H), dtype=jnp.float32).astype(jnp.bfloat16)
    # ReplicatedLinear weight shapes: (out_features, in_features)
    w1 = (jax.random.normal(k1, (F_dim, H), dtype=jnp.float32) * 0.05
          ).astype(jnp.bfloat16)
    w2 = (jax.random.normal(k2, (H, F_dim), dtype=jnp.float32) * 0.05
          ).astype(jnp.bfloat16)
    w3 = (jax.random.normal(k3, (F_dim, H), dtype=jnp.float32) * 0.05
          ).astype(jnp.bfloat16)

    ref = _ref_mixtral_mlp(x, w1, w2, w3)

    # Explicit small tiles: 2 token tiles x 4 FFN tiles + T padding.
    out = jax.block_until_ready(mixtral_mlp(x, w1, w2, w3, tm=128, tf=128))
    assert out.shape == (T, H)
    err = float(jnp.max(jnp.abs(out.astype(jnp.float32) - ref)))
    assert jnp.allclose(out.astype(jnp.float32), ref, atol=2e-2, rtol=2e-2), (
        f"mismatch vs reference (explicit tiles), max abs err = {err}")

    # Auto (generation-aware) tile selection path.
    out2 = jax.block_until_ready(mixtral_mlp(x, w1, w2, w3))
    err2 = float(jnp.max(jnp.abs(out2.astype(jnp.float32) - ref)))
    assert jnp.allclose(out2.astype(jnp.float32), ref, atol=2e-2, rtol=2e-2), (
        f"mismatch vs reference (auto tiles), max abs err = {err2}")

    print("KERNEL_OK")
</pallas_src>

<mosaic_0001>
module attributes {stable_mosaic.version = 11 : i64} {
  func.func @_mixtral_mlp_kernel(%arg0: i32, %arg1: i32, %arg2: memref<128x256xbf16, #tpu.memory_space<vmem>>, %arg3: memref<1x256x256xbf16, #tpu.memory_space<vmem>>, %arg4: memref<1x128x256xbf16, #tpu.memory_space<vmem>>, %arg5: memref<128x256xbf16, #tpu.memory_space<vmem>>, %arg6: memref<128x256xf32, #tpu.memory_space<vmem>>) attributes {dimension_semantics = [#tpu.dimension_semantics<parallel>, #tpu.dimension_semantics<arbitrary>], iteration_bounds = array<i64: 2, 4>, scalar_prefetch = 0 : i64, scratch_operands = 1 : i64, tpu.core_type = #tpu.core_type<tc>, window_params = [{transform_indices = @transform_0, window_bounds = array<i64: 128, 256>}, {transform_indices = @transform_1, window_bounds = array<i64: 1, 256, 256>}, {transform_indices = @transform_2, window_bounds = array<i64: 1, 128, 256>}, {transform_indices = @transform_3, window_bounds = array<i64: 128, 256>}]} {
    %c0_i32 = arith.constant 0 : i32
    %0 = arith.cmpi eq, %arg1, %c0_i32 : i32
    %1 = arith.extui %0 : i1 to i32
    %c0_i32_0 = arith.constant 0 : i32
    %2 = arith.cmpi ne, %1, %c0_i32_0 : i32
    scf.if %2 {
      %cst_15 = arith.constant 0.000000e+00 : f32
      %26 = vector.broadcast %cst_15 : f32 to vector<128x256xf32>
      %c0_16 = arith.constant 0 : index
      %c0_17 = arith.constant 0 : index
      %27 = vector.load %arg6[%c0_16, %c0_17] : memref<128x256xf32, #tpu.memory_space<vmem>>, vector<128x256xf32>
      tpu.vector_store %arg6[%c0_16, %c0_17], %26 {strides = array<i32>} : memref<128x256xf32, #tpu.memory_space<vmem>>, vector<128x256xf32>,
    } else {
    }
    %c0 = arith.constant 0 : index
    %c0_1 = arith.constant 0 : index
    %3 = vector.load %arg2[%c0, %c0_1] : memref<128x256xbf16, #tpu.memory_space<vmem>>, vector<128x256xbf16>
    %c0_2 = arith.constant 0 : index
    %c0_3 = arith.constant 0 : index
    %c0_4 = arith.constant 0 : index
    %4 = vector.load %arg3[%c0_2, %c0_3, %c0_4] : memref<1x256x256xbf16, #tpu.memory_space<vmem>>, vector<1x256x256xbf16>
    %5 = vector.shape_cast %4 : vector<1x256x256xbf16> to vector<256x256xbf16>
    %cst = arith.constant dense<0.000000e+00> : vector<128x256xf32>
    %6 = tpu.matmul %3, %5, %cst {dimension_numbers = #tpu.dot_dimension_numbers<[1], [0], [0], [1], [0, 0, 1, 1], [], []>} : vector<128x256xbf16>, vector<256x256xbf16>, vector<128x256xf32> -> vector<128x256xf32>
    %7 = vector.extract_strided_slice %6 {offsets = [0, 0], sizes = [128, 128], strides = [1, 1]} : vector<128x256xf32> to vector<128x128xf32>
    %8 = vector.extract_strided_slice %6 {offsets = [0, 128], sizes = [128, 128], strides = [1, 1]} : vector<128x256xf32> to vector<128x128xf32>
    %9 = arith.negf %7 : vector<128x128xf32>
    %10 = math.exp %9 : vector<128x128xf32>
    %cst_5 = arith.constant 1.000000e+00 : f32
    %11 = vector.broadcast %cst_5 : f32 to vector<128x128xf32>
    %12 = arith.addf %11, %10 : vector<128x128xf32>
    %13 = arith.divf %11, %12 : vector<128x128xf32>
    %14 = arith.mulf %7, %13 : vector<128x128xf32>
    %15 = arith.mulf %14, %8 : vector<128x128xf32>
    %c0_6 = arith.constant 0 : index
    %c0_7 = arith.constant 0 : index
    %16 = vector.load %arg6[%c0_6, %c0_7] : memref<128x256xf32, #tpu.memory_space<vmem>>, vector<128x256xf32>
    %17 = arith.truncf %15 : vector<128x128xf32> to vector<128x128xbf16>
    %c0_8 = arith.constant 0 : index
    %c0_9 = arith.constant 0 : index
    %c0_10 = arith.constant 0 : index
    %18 = vector.load %arg4[%c0_8, %c0_9, %c0_10] : memref<1x128x256xbf16, #tpu.memory_space<vmem>>, vector<1x128x256xbf16>
    %19 = vector.shape_cast %18 : vector<1x128x256xbf16> to vector<128x256xbf16>
    %cst_11 = arith.constant dense<0.000000e+00> : vector<128x256xf32>
    %20 = tpu.matmul %17, %19, %cst_11 {dimension_numbers = #tpu.dot_dimension_numbers<[1], [0], [0], [1], [0, 0, 1, 1], [], []>} : vector<128x128xbf16>, vector<128x256xbf16>, vector<128x256xf32> -> vector<128x256xf32>
    %21 = arith.addf %16, %20 : vector<128x256xf32>
    %c0_12 = arith.constant 0 : index
    %c0_13 = arith.constant 0 : index
    %22 = vector.load %arg6[%c0_12, %c0_13] : memref<128x256xf32, #tpu.memory_space<vmem>>, vector<128x256xf32>
    tpu.vector_store %arg6[%c0_12, %c0_13], %21 {strides = array<i32>} : memref<128x256xf32, #tpu.memory_space<vmem>>, vector<128x256xf32>,
    %c3_i32 = arith.constant 3 : i32
    %23 = arith.cmpi eq, %arg1, %c3_i32 : i32
    %24 = arith.extui %23 : i1 to i32
    %c0_i32_14 = arith.constant 0 : i32
    %25 = arith.cmpi ne, %24, %c0_i32_14 : i32
    scf.if %25 {
      %c0_15 = arith.constant 0 : index
      %c0_16 = arith.constant 0 : index
      %26 = vector.load %arg6[%c0_15, %c0_16] : memref<128x256xf32, #tpu.memory_space<vmem>>, vector<128x256xf32>
      %27 = arith.truncf %26 : vector<128x256xf32> to vector<128x256xbf16>
      %c0_17 = arith.constant 0 : index
      %c0_18 = arith.constant 0 : index
      %28 = vector.load %arg5[%c0_17, %c0_18] : memref<128x256xbf16, #tpu.memory_space<vmem>>, vector<128x256xbf16>
      tpu.vector_store %arg5[%c0_17, %c0_18], %27 {strides = array<i32>} : memref<128x256xbf16, #tpu.memory_space<vmem>>, vector<128x256xbf16>,
    } else {
    }
    return
  }
  func.func @transform_0(%arg0: i32, %arg1: i32) -> (i32, i32) {
    %c0_i32 = arith.constant 0 : i32
    %c0_i32_0 = arith.constant 0 : i32
    return %arg0, %c0_i32 : i32, i32
  }
  func.func @transform_1(%arg0: i32, %arg1: i32) -> (i32, i32, i32) {
    %c0_i32 = arith.constant 0 : i32
    %c0_i32_0 = arith.constant 0 : i32
    %c0_i32_1 = arith.constant 0 : i32
    return %arg1, %c0_i32, %c0_i32_0 : i32, i32, i32
  }
  func.func @transform_2(%arg0: i32, %arg1: i32) -> (i32, i32, i32) {
    %c0_i32 = arith.constant 0 : i32
    %c0_i32_0 = arith.constant 0 : i32
    %c0_i32_1 = arith.constant 0 : i32
    return %arg1, %c0_i32, %c0_i32_0 : i32, i32, i32
  }
  func.func @transform_3(%arg0: i32, %arg1: i32) -> (i32, i32) {
    %c0_i32 = arith.constant 0 : i32
    %c0_i32_0 = arith.constant 0 : i32
    return %arg0, %c0_i32 : i32, i32
  }
}

</mosaic_0001>

<llo_original>
// kernel: mixtral_mlp.1
$region0: #{mixtral_mlp.1}
  #allocation0 [shape = 'u32[]', space=smem, size = 0x4, offset = 0x4, fixed_abs, tag = 'smem constant byte address 0x4 - core index']
  #allocation1 [shape = 'u32[144,128]{1,0:T(1,128)}', space=vmem, size = 0x12000, scoped, tag = 'internal scratch']
  #allocation2 [shape = 'f32[128,256]{1,0:T(8,128)}', space=vmem, size = 0x20000, scoped, tag = 'scratch operand']
  %s0 = inlined_call_operand.vmem [shape: bf16[256,256], index: 0, kind: input, shape index: {}]
  %s1 = inlined_call_operand.vmem [shape: bf16[4,256,256], index: 1, kind: input, shape index: {}]
  %s2 = inlined_call_operand.vmem [shape: bf16[4,128,256], index: 2, kind: input, shape index: {}]
  %s3 = inlined_call_operand.vmem [shape: bf16[256,256], index: 3, kind: output, shape index: {}]
  %s4 = sld [smem:[#allocation0]]
  $region53: #{mixtral_mlp.1} parent=0
    _
  %s6 = ssub.s32 1, %s4
  %s7 = scalar_select 0, %s6, %s4
  loop: start=0, step=1, limit=10
  $region2: #{mixtral_mlp.1} parent=0 // loop_pre_header
    _
  $region3: #{mixtral_mlp.1} parent=0 // loop_header
    %s9 = sphi 0, %s13
    %p10 = scmp.ge.s32.totalorder %s9, 10
    %s16 = sphi 0, %s28
    %s17 = sphi 0, %s24
    %s18 = sphi 0, %s16
    %s19 = sphi 0, %s17
    %s20 = sphi 0, %s18
    %s21 = sphi 0, %s19
    %s31 = sphi 0, %s33
    %s34 = sphi 0, %s31
    %s35 = sphi 0, %s34
    %s51 = sphi 0, %s35
    %s57 = sphi 0, %s59
    %s60 = sphi 0, %s57
    %s61 = sphi 0, %s60
    %s77 = sphi 0, %s61
    %s83 = sphi 0, %s85
    %s86 = sphi 0, %s83
    %s87 = sphi 0, %s86
    %s103 = sphi 0, %s87
    %s109 = sphi 0, %s111
    %s112 = sphi 0, %s109
    %s113 = sphi 0, %s112
    %s129 = sphi 0, %s113
  $region4: #{mixtral_mlp.1} parent=0 // loop_header_branch
    %12 = sbr.rel (%p10) target = $region8
  $region5: #{mixtral_mlp.1} parent=0 // loop_body
    %s14 = ssub.s32 %s9, 1
    %s15 = ssub.s32 %s9, 2
    %s22 = sadd.s32 1, %s17
    %p23 = scmp.ge.s32.totalorder %s22, 4
    %s24 = scalar_select %p23, 0, %s22
    %s25 = sadd.s32 1, %s16
    %s26 = scalar_select %p23, %s25, %s16
    %p27 = scmp.ge.s32.totalorder %s26, 2
    %s28 = scalar_select %p27, 0, %s26
    %s29 = ssub.s32 %s16, %s28
    %p30 = scmp.eq.s32.totalorder %s29, 0
    %s32 = sadd.s32 %s31, 1
    %s33 = scalar_select %p30, %s31, %s32
    %p36 = pneg %p30
    %p37 = scmp.eq.s32.totalorder %s9, 7
    %p38 = por %p36, %p37
    %p39 = scmp.ne.s32.totalorder %s31, %s34
    %p40 = scmp.eq.s32.totalorder %s9, 0
    %p41 = por %p39, %p40
    %p42 = scmp.ne.s32.totalorder %s31, %s34
    %p43 = scmp.eq.s32.totalorder %s14, 7
    %p44 = por %p42, %p43
    %p45 = scmp.ne.s32.totalorder %s34, %s35
    %p46 = scmp.eq.s32.totalorder %s14, 0
    %p47 = por %p45, %p46
    %p48 = scmp.ne.s32.totalorder %s34, %s35
    %p49 = scmp.eq.s32.totalorder %s15, 7
    %p50 = por %p48, %p49
    %p52 = scmp.ne.s32.totalorder %s35, %s51
    %p53 = scmp.eq.s32.totalorder %s15, 0
    %p54 = por %p52, %p53
    %s55 = ssub.s32 %s17, %s24
    %p56 = scmp.eq.s32.totalorder %s55, 0
    %s58 = sadd.s32 %s57, 1
    %s59 = scalar_select %p56, %s57, %s58
    %p62 = pneg %p56
    %p63 = scmp.eq.s32.totalorder %s9, 7
    %p64 = por %p62, %p63
    %p65 = scmp.ne.s32.totalorder %s57, %s60
    %p66 = scmp.eq.s32.totalorder %s9, 0
    %p67 = por %p65, %p66
    %p68 = scmp.ne.s32.totalorder %s57, %s60
    %p69 = scmp.eq.s32.totalorder %s14, 7
    %p70 = por %p68, %p69
    %p71 = scmp.ne.s32.totalorder %s60, %s61
    %p72 = scmp.eq.s32.totalorder %s14, 0
    %p73 = por %p71, %p72
    %p74 = scmp.ne.s32.totalorder %s60, %s61
    %p75 = scmp.eq.s32.totalorder %s15, 7
    %p76 = por %p74, %p75
    %p78 = scmp.ne.s32.totalorder %s61, %s77
    %p79 = scmp.eq.s32.totalorder %s15, 0
    %p80 = por %p78, %p79
    %s81 = ssub.s32 %s17, %s24
    %p82 = scmp.eq.s32.totalorder %s81, 0
    %s84 = sadd.s32 %s83, 1
    %s85 = scalar_select %p82, %s83, %s84
    %p88 = pneg %p82
    %p89 = scmp.eq.s32.totalorder %s9, 7
    %p90 = por %p88, %p89
    %p91 = scmp.ne.s32.totalorder %s83, %s86
    %p92 = scmp.eq.s32.totalorder %s9, 0
    %p93 = por %p91, %p92
    %p94 = scmp.ne.s32.totalorder %s83, %s86
    %p95 = scmp.eq.s32.totalorder %s14, 7
    %p96 = por %p94, %p95
    %p97 = scmp.ne.s32.totalorder %s86, %s87
    %p98 = scmp.eq.s32.totalorder %s14, 0
    %p99 = por %p97, %p98
    %p100 = scmp.ne.s32.totalorder %s86, %s87
    %p101 = scmp.eq.s32.totalorder %s15, 7
    %p102 = por %p100, %p101
    %p104 = scmp.ne.s32.totalorder %s87, %s103
    %p105 = scmp.eq.s32.totalorder %s15, 0
    %p106 = por %p104, %p105
    %s107 = ssub.s32 %s16, %s28
    %p108 = scmp.eq.s32.totalorder %s107, 0
    %s110 = sadd.s32 %s109, 1
    %s111 = scalar_select %p108, %s109, %s110
    %p114 = pneg %p108
    %p115 = scmp.eq.s32.totalorder %s9, 7
    %p116 = por %p114, %p115
    %p117 = scmp.ne.s32.totalorder %s109, %s112
    %p118 = scmp.eq.s32.totalorder %s9, 0
    %p119 = por %p117, %p118
    %p120 = scmp.ne.s32.totalorder %s109, %s112
    %p121 = scmp.eq.s32.totalorder %s14, 7
    %p122 = por %p120, %p121
    %p123 = scmp.ne.s32.totalorder %s112, %s113
    %p124 = scmp.eq.s32.totalorder %s14, 0
    %p125 = por %p123, %p124
    %p126 = scmp.ne.s32.totalorder %s112, %s113
    %p127 = scmp.eq.s32.totalorder %s15, 7
    %p128 = por %p126, %p127
    %p130 = scmp.ne.s32.totalorder %s113, %s129
    %p131 = scmp.eq.s32.totalorder %s15, 0
    %p132 = por %p130, %p131
    %p133 = scmp.le.s32.totalorder 1, %s9
    %p134 = scmp.lt.s32.totalorder %s9, 9
    %p135 = pnand %p133, %p134
    %p136 = pneg %p135
    // Predicated region
    $region9: #{mixtral_mlp.1} parent=5 // pred_check
      _
    $region10: #{mixtral_mlp.1} parent=5 // pred_check_branch
      %138 = sbr.rel (%p135) target = $region12
    $region11: #{mixtral_mlp.1} parent=5 // pred_region
      %s139 = ssub.s32 %s9, 1
    $region12: #{mixtral_mlp.1} parent=5 // pred_fallthru
      _
    %p140 = scmp.lt.s32.totalorder %s9, 8
    // Predicated region
    $region13: #{mixtral_mlp.1} parent=5 // pred_check
      %p141 = pneg %p140
    $region14: #{mixtral_mlp.1} parent=5 // pred_check_branch
      %143 = sbr.rel (%p141) target = $region16
    $region15: #{mixtral_mlp.1} parent=5 // pred_region
      // Predicated region
      $region17: #{mixtral_mlp.1} parent=15 // pred_check
        %p144 = pneg %p41
      $region18: #{mixtral_mlp.1} parent=15 // pred_check_branch
        %146 = sbr.rel (%p144) target = $region20
      $region19: #{mixtral_mlp.1} parent=15 // pred_region
        %s147 = smul.u32 16, %s16
        %p148 = scmp.lt.s32.totalorder %s147, 31
        %s149 = scalar_select %p148, %s147, 31
        %s150 = smul.addr %s149, 2
        %s151 = smul.addr %s150, 4
        %s152 = scalar_lea.vmem %s0, %s151
        %s153 = smul.u32 16, %s16
      $region20: #{mixtral_mlp.1} parent=15 // pred_fallthru
        _
      // Predicated region
      $region21: #{mixtral_mlp.1} parent=15 // pred_check
        %p154 = pneg %p67
      $region22: #{mixtral_mlp.1} parent=15 // pred_check_branch
        %156 = sbr.rel (%p154) target = $region24
      $region23: #{mixtral_mlp.1} parent=15 // pred_region
        %p157 = scmp.lt.s32.totalorder %s17, 3
        %s158 = scalar_select %p157, %s17, 3
        %s159 = smul.addr %s158, 64
        %s160 = smul.addr %s159, 4
        %s161 = scalar_lea.vmem %s1, %s160
      $region24: #{mixtral_mlp.1} parent=15 // pred_fallthru
        _
      // Predicated region
      $region25: #{mixtral_mlp.1} parent=15 // pred_check
        %p162 = pneg %p93
      $region26: #{mixtral_mlp.1} parent=15 // pred_check_branch
        %164 = sbr.rel (%p162) target = $region28
      $region27: #{mixtral_mlp.1} parent=15 // pred_region
        %p165 = scmp.lt.s32.totalorder %s17, 3
        %s166 = scalar_select %p165, %s17, 3
        %s167 = smul.addr %s166, 32
        %s168 = smul.addr %s167, 4
        %s169 = scalar_lea.vmem %s2, %s168
      $region28: #{mixtral_mlp.1} parent=15 // pred_fallthru
        _
    $region16: #{mixtral_mlp.1} parent=5 // pred_fallthru
      _
    %p170 = scmp.le.s32.totalorder 1, %s9
    %p171 = scmp.lt.s32.totalorder %s9, 9
    %p172 = pnand %p170, %p171
    %p173 = pneg %p172
    // Predicated region
    $region29: #{mixtral_mlp.1} parent=5 // pred_check
      _
    $region30: #{mixtral_mlp.1} parent=5 // pred_check_branch
      %175 = sbr.rel (%p172) target = $region32
    $region31: #{mixtral_mlp.1} parent=5 // pred_region
      %s176 = ssub.s32 %s9, 1
      %s177 = smul.u32 16, %s18
      %p178 = scmp.lt.s32.totalorder %s177, 31
      %s179 = scalar_select %p178, %s177, 31
      %s180 = smul.addr %s179, 2
      %s181 = smul.addr %s180, 4
      %s182 = scalar_lea.vmem %s0, %s181
      %p183 = pneg %p47
      %p184 = pneg %p44
      %p185 = scmp.lt.s32.totalorder %s19, 3
      %s186 = scalar_select %p185, %s19, 3
      %s187 = smul.addr %s186, 64
      %s188 = smul.addr %s187, 4
      %s189 = scalar_lea.vmem %s1, %s188
      %p190 = pneg %p73
      %p191 = pneg %p70
      %p192 = scmp.lt.s32.totalorder %s19, 3
      %s193 = scalar_select %p192, %s19, 3
      %s194 = smul.addr %s193, 32
      %s195 = smul.addr %s194, 4
      %s196 = scalar_lea.vmem %s2, %s195
      %p197 = pneg %p99
      %p198 = pneg %p96
      %p199 = pneg %p125
      %p200 = pneg %p122
      %s201 = smul.u32 16, %s18
      %p202 = scmp.lt.s32.totalorder %s201, 31
      %s203 = scalar_select %p202, %s201, 31
      %s204 = smul.addr %s203, 2
      %s205 = smul.addr %s204, 4
      %s206 = scalar_lea.vmem %s3, %s205
      %s207 = smul.u32 16, %s18
      %p208 = scmp.lt.s32.totalorder %s207, 31
      %s209 = scalar_select %p208, %s207, 31
      %s210 = smul.addr %s209, 2
      %s211 = smul.addr %s210, 4
      %s212 = scalar_lea.vmem %s0, %s211
      %s213 = smul.u32 16, %s18
      %p214 = scmp.lt.s32.totalorder %s19, 3
      %s215 = scalar_select %p214, %s19, 3
      %s216 = smul.addr %s215, 64
      %s217 = smul.addr %s216, 4
      %s218 = scalar_lea.vmem %s1, %s217
      %p219 = scmp.lt.s32.totalorder %s19, 3
      %s220 = scalar_select %p219, %s19, 3
      %s221 = smul.addr %s220, 32
      %s222 = smul.addr %s221, 4
      %s223 = scalar_lea.vmem %s2, %s222
      %s224 = smul.u32 16, %s18
      %p225 = scmp.lt.s32.totalorder %s224, 31
      %s226 = scalar_select %p225, %s224, 31
      %s227 = smul.addr %s226, 2
      %s228 = smul.addr %s227, 4
      %s229 = scalar_lea.vmem %s3, %s228
      %s230 = smul.u32 16, %s18
      %p232 = scmp.eq.s32.totalorder %s19, 0
      // Predicated region
      $region33: #{mixtral_mlp.1} parent=31 // pred_check
        %p233 = pneg %p232
      $region34: #{mixtral_mlp.1} parent=31 // pred_check_branch
        %235 = sbr.rel (%p233) target = $region36
      $region35: #{mixtral_mlp.1} parent=31 // pred_region
        %236 = vst [vmem:[#allocation2] sm:$0xff] 0.0
        %237 = vst [vmem:[#allocation2 + $0x8] sm:$0xff] 0.0
        %238 = vst [vmem:[#allocation2 + $0x10] sm:$0xff] 0.0
        %239 = vst [vmem:[#allocation2 + $0x18] sm:$0xff] 0.0
        %240 = vst [vmem:[#allocation2 + $0x20] sm:$0xff] 0.0
        %241 = vst [vmem:[#allocation2 + $0x28] sm:$0xff] 0.0
        %242 = vst [vmem:[#allocation2 + $0x30] sm:$0xff] 0.0
        %243 = vst [vmem:[#allocation2 + $0x38] sm:$0xff] 0.0
        %244 = vst [vmem:[#allocation2 + $0x40] sm:$0xff] 0.0
        %245 = vst [vmem:[#allocation2 + $0x48] sm:$0xff] 0.0
        %246 = vst [vmem:[#allocation2 + $0x50] sm:$0xff] 0.0
        %247 = vst [vmem:[#allocation2 + $0x58] sm:$0xff] 0.0
        %248 = vst [vmem:[#allocation2 + $0x60] sm:$0xff] 0.0
        %249 = vst [vmem:[#allocation2 + $0x68] sm:$0xff] 0.0
        %250 = vst [vmem:[#allocation2 + $0x70] sm:$0xff] 0.0
        %251 = vst [vmem:[#allocation2 + $0x78] sm:$0xff] 0.0
        %252 = vst [vmem:[#allocation2 + $0x80] sm:$0xff] 0.0
        %253 = vst [vmem:[#allocation2 + $0x88] sm:$0xff] 0.0
        %254 = vst [vmem:[#allocation2 + $0x90] sm:$0xff] 0.0
        %255 = vst [vmem:[#allocation2 + $0x98] sm:$0xff] 0.0
        %256 = vst [vmem:[#allocation2 + $0xa0] sm:$0xff] 0.0
        %257 = vst [vmem:[#allocation2 + $0xa8] sm:$0xff] 0.0
        %258 = vst [vmem:[#allocation2 + $0xb0] sm:$0xff] 0.0
        %259 = vst [vmem:[#allocation2 + $0xb8] sm:$0xff] 0.0
        %260 = vst [vmem:[#allocation2 + $0xc0] sm:$0xff] 0.0
        %261 = vst [vmem:[#allocation2 + $0xc8] sm:$0xff] 0.0
        %262 = vst [vmem:[#allocation2 + $0xd0] sm:$0xff] 0.0
        %263 = vst [vmem:[#allocation2 + $0xd8] sm:$0xff] 0.0
        %264 = vst [vmem:[#allocation2 + $0xe0] sm:$0xff] 0.0
        %265 = vst [vmem:[#allocation2 + $0xe8] sm:$0xff] 0.0
        %266 = vst [vmem:[#allocation2 + $0xf0] sm:$0xff] 0.0
        %267 = vst [vmem:[#allocation2 + $0xf8] sm:$0xff] 0.0
      $region36: #{mixtral_mlp.1} parent=31 // pred_fallthru
        _
      %v268 = vld [vmem:[%s212] sm:$0xff]
      %v269 = vld [vmem:[%s212 + $0x8] sm:$0xff]
      %v270 = vld [vmem:[%s212 + $0x10] sm:$0xff]
      %v271 = vld [vmem:[%s212 + $0x18] sm:$0xff]
      %v272 = vld [vmem:[%s212 + $0x20] sm:$0xff]
      %v273 = vld [vmem:[%s212 + $0x28] sm:$0xff]
      %v274 = vld [vmem:[%s212 + $0x30] sm:$0xff]
      %v275 = vld [vmem:[%s212 + $0x38] sm:$0xff]
      %v276 = vld [vmem:[%s212 + $0x40] sm:$0xff]
      %v277 = vld [vmem:[%s212 + $0x48] sm:$0xff]
      %v278 = vld [vmem:[%s212 + $0x50] sm:$0xff]
      %v279 = vld [vmem:[%s212 + $0x58] sm:$0xff]
      %v280 = vld [vmem:[%s212 + $0x60] sm:$0xff]
      %v281 = vld [vmem:[%s212 + $0x68] sm:$0xff]
      %v282 = vld [vmem:[%s212 + $0x70] sm:$0xff]
      %v283 = vld [vmem:[%s212 + $0x78] sm:$0xff]
      %v284 = vld [vmem:[%s218] sm:$0xff]
      %v285 = vld [vmem:[%s218 + $0x8] sm:$0xff]
      %v286 = vld [vmem:[%s218 + $0x10] sm:$0xff]
      %v287 = vld [vmem:[%s218 + $0x18] sm:$0xff]
      %v288 = vld [vmem:[%s218 + $0x20] sm:$0xff]
      %v289 = vld [vmem:[%s218 + $0x28] sm:$0xff]
      %v290 = vld [vmem:[%s218 + $0x30] sm:$0xff]
      %v291 = vld [vmem:[%s218 + $0x38] sm:$0xff]
      %v292 = vld [vmem:[%s218 + $0x40] sm:$0xff]
      %v293 = vld [vmem:[%s218 + $0x48] sm:$0xff]
      %v294 = vld [vmem:[%s218 + $0x50] sm:$0xff]
      %v295 = vld [vmem:[%s218 + $0x58] sm:$0xff]
      %v296 = vld [vmem:[%s218 + $0x60] sm:$0xff]
      %v297 = vld [vmem:[%s218 + $0x68] sm:$0xff]
      %v298 = vld [vmem:[%s218 + $0x70] sm:$0xff]
      %v299 = vld [vmem:[%s218 + $0x78] sm:$0xff]
      %v300 = vld [vmem:[%s218 + $0x80] sm:$0xff]
      %v301 = vld [vmem:[%s218 + $0x88] sm:$0xff]
      %v302 = vld [vmem:[%s218 + $0x90] sm:$0xff]
      %v303 = vld [vmem:[%s218 + $0x98] sm:$0xff]
      %v304 = vld [vmem:[%s218 + $0xa0] sm:$0xff]
      %v305 = vld [vmem:[%s218 + $0xa8] sm:$0xff]
      %v306 = vld [vmem:[%s218 + $0xb0] sm:$0xff]
      %v307 = vld [vmem:[%s218 + $0xb8] sm:$0xff]
      %v308 = vld [vmem:[%s218 + $0xc0] sm:$0xff]
      %v309 = vld [vmem:[%s218 + $0xc8] sm:$0xff]
      %v310 = vld [vmem:[%s218 + $0xd0] sm:$0xff]
      %v311 = vld [vmem:[%s218 + $0xd8] sm:$0xff]
      %v312 = vld [vmem:[%s218 + $0xe0] sm:$0xff]
      %v313 = vld [vmem:[%s218 + $0xe8] sm:$0xff]
      %v314 = vld [vmem:[%s218 + $0xf0] sm:$0xff]
      %v315 = vld [vmem:[%s218 + $0xf8] sm:$0xff]
      %v332 = vunpack.c.l.b16 %v268
      %v333 = vunpack.c.h.b16 %v268
      %v334 = vunpack.c.l.b16 %v269
      %v335 = vunpack.c.h.b16 %v269
      %v336 = vunpack.c.l.b16 %v270
      %v337 = vunpack.c.h.b16 %v270
      %v338 = vunpack.c.l.b16 %v271
      %v339 = vunpack.c.h.b16 %v271
      %v340 = vunpack.c.l.b16 %v272
      %v341 = vunpack.c.h.b16 %v272
      %v342 = vunpack.c.l.b16 %v273
      %v343 = vunpack.c.h.b16 %v273
      %v344 = vunpack.c.l.b16 %v274
      %v345 = vunpack.c.h.b16 %v274
      %v346 = vunpack.c.l.b16 %v275
      %v347 = vunpack.c.h.b16 %v275
      %v348 = vunpack.c.l.b16 %v276
      %v349 = vunpack.c.h.b16 %v276
      %v350 = vunpack.c.l.b16 %v277
      %v351 = vunpack.c.h.b16 %v277
      %v352 = vunpack.c.l.b16 %v278
      %v353 = vunpack.c.h.b16 %v278
      %v354 = vunpack.c.l.b16 %v279
      %v355 = vunpack.c.h.b16 %v279
      %v356 = vunpack.c.l.b16 %v280
      %v357 = vunpack.c.h.b16 %v280
      %v358 = vunpack.c.l.b16 %v281
      %v359 = vunpack.c.h.b16 %v281
      %v360 = vunpack.c.l.b16 %v282
      %v361 = vunpack.c.h.b16 %v282
      %v362 = vunpack.c.l.b16 %v283
      %v363 = vunpack.c.h.b16 %v283
      %v364 = vpack.c.b16 %v334, %v332
      %v365 = vpack.c.b16 %v335, %v333
      %v366 = vpack.c.b16 %v338, %v336
      %v367 = vpack.c.b16 %v339, %v337
      %v368 = vpack.c.b16 %v342, %v340
      %v369 = vpack.c.b16 %v343, %v341
      %v370 = vpack.c.b16 %v346, %v344
      %v371 = vpack.c.b16 %v347, %v345
      %v372 = vpack.c.b16 %v350, %v348
      %v373 = vpack.c.b16 %v351, %v349
      %v374 = vpack.c.b16 %v354, %v352
      %v375 = vpack.c.b16 %v355, %v353
      %v376 = vpack.c.b16 %v358, %v356
      %v377 = vpack.c.b16 %v359, %v357
      %v378 = vpack.c.b16 %v362, %v360
      %v379 = vpack.c.b16 %v363, %v361
      %v428 = vunpack.c.l.b16 %v284
      %v429 = vunpack.c.h.b16 %v284
      %v430 = vunpack.c.l.b16 %v285
      %v431 = vunpack.c.h.b16 %v285
      %v432 = vunpack.c.l.b16 %v286
      %v433 = vunpack.c.h.b16 %v286
      %v434 = vunpack.c.l.b16 %v287
      %v435 = vunpack.c.h.b16 %v287
      %v436 = vunpack.c.l.b16 %v288
      %v437 = vunpack.c.h.b16 %v288
      %v438 = vunpack.c.l.b16 %v289
      %v439 = vunpack.c.h.b16 %v289
      %v440 = vunpack.c.l.b16 %v290
      %v441 = vunpack.c.h.b16 %v290
      %v442 = vunpack.c.l.b16 %v291
      %v443 = vunpack.c.h.b16 %v291
      %v444 = vunpack.c.l.b16 %v292
      %v445 = vunpack.c.h.b16 %v292
      %v446 = vunpack.c.l.b16 %v293
      %v447 = vunpack.c.h.b16 %v293
      %v448 = vunpack.c.l.b16 %v294
      %v449 = vunpack.c.h.b16 %v294
      %v450 = vunpack.c.l.b16 %v295
      %v451 = vunpack.c.h.b16 %v295
      %v452 = vunpack.c.l.b16 %v296
      %v453 = vunpack.c.h.b16 %v296
      %v454 = vunpack.c.l.b16 %v297
      %v455 = vunpack.c.h.b16 %v297
      %v456 = vunpack.c.l.b16 %v298
      %v457 = vunpack.c.h.b16 %v298
      %v458 = vunpack.c.l.b16 %v299
      %v459 = vunpack.c.h.b16 %v299
      %v460 = vunpack.c.l.b16 %v300
      %v461 = vunpack.c.h.b16 %v300
      %v462 = vunpack.c.l.b16 %v301
      %v463 = vunpack.c.h.b16 %v301
      %v464 = vunpack.c.l.b16 %v302
      %v465 = vunpack.c.h.b16 %v302
      %v466 = vunpack.c.l.b16 %v303
      %v467 = vunpack.c.h.b16 %v303
      %v468 = vunpack.c.l.b16 %v304
      %v469 = vunpack.c.h.b16 %v304
      %v470 = vunpack.c.l.b16 %v305
      %v471 = vunpack.c.h.b16 %v305
      %v472 = vunpack.c.l.b16 %v306
      %v473 = vunpack.c.h.b16 %v306
      %v474 = vunpack.c.l.b16 %v307
      %v475 = vunpack.c.h.b16 %v307
      %v476 = vunpack.c.l.b16 %v308
      %v477 = vunpack.c.h.b16 %v308
      %v478 = vunpack.c.l.b16 %v309
      %v479 = vunpack.c.h.b16 %v309
      %v480 = vunpack.c.l.b16 %v310
      %v481 = vunpack.c.h.b16 %v310
      %v482 = vunpack.c.l.b16 %v311
      %v483 = vunpack.c.h.b16 %v311
      %v484 = vunpack.c.l.b16 %v312
      %v485 = vunpack.c.h.b16 %v312
      %v486 = vunpack.c.l.b16 %v313
      %v487 = vunpack.c.h.b16 %v313
      %v488 = vunpack.c.l.b16 %v314
      %v489 = vunpack.c.h.b16 %v314
      %v490 = vunpack.c.l.b16 %v315
      %v491 = vunpack.c.h.b16 %v315
      %v492 = vpack.c.b16 %v430, %v428
      %v493 = vpack.c.b16 %v431, %v429
      %v494 = vpack.c.b16 %v434, %v432
      %v495 = vpack.c.b16 %v435, %v433
      %v496 = vpack.c.b16 %v438, %v436
      %v497 = vpack.c.b16 %v439, %v437
      %v498 = vpack.c.b16 %v442, %v440
      %v499 = vpack.c.b16 %v443, %v441
      %v500 = vpack.c.b16 %v446, %v444
      %v501 = vpack.c.b16 %v447, %v445
      %v502 = vpack.c.b16 %v450, %v448
      %v503 = vpack.c.b16 %v451, %v449
      %v504 = vpack.c.b16 %v454, %v452
      %v505 = vpack.c.b16 %v455, %v453
      %v506 = vpack.c.b16 %v458, %v456
      %v507 = vpack.c.b16 %v459, %v457
      %v508 = vpack.c.b16 %v462, %v460
      %v509 = vpack.c.b16 %v463, %v461
      %v510 = vpack.c.b16 %v466, %v464
      %v511 = vpack.c.b16 %v467, %v465
      %v512 = vpack.c.b16 %v470, %v468
      %v513 = vpack.c.b16 %v471, %v469
      %v514 = vpack.c.b16 %v474, %v472
      %v515 = vpack.c.b16 %v475, %v473
      %v516 = vpack.c.b16 %v478, %v476
      %v517 = vpack.c.b16 %v479, %v477
      %v518 = vpack.c.b16 %v482, %v480
      %v519 = vpack.c.b16 %v483, %v481
      %v520 = vpack.c.b16 %v486, %v484
      %v521 = vpack.c.b16 %v487, %v485
      %v522 = vpack.c.b16 %v490, %v488
      %v523 = vpack.c.b16 %v491, %v489
      %556 = vmatprep.subr.bf16.mxu0 %v493
      %557 = vmatpush1.bf16.msra.mxu0 %v492
      %558 = vmatprep.subr.bf16.mxu0 %v495
      %559 = vmatpush1.bf16.msra.mxu0 %v494
      %560 = vmatprep.subr.bf16.mxu0 %v497
      %561 = vmatpush1.bf16.msra.mxu0 %v496
      %562 = vmatprep.subr.bf16.mxu0 %v499
      %563 = vmatpush1.bf16.msra.mxu0 %v498
      %564 = vmatprep.subr.bf16.mxu0 %v501
      %565 = vmatpush1.bf16.msra.mxu0 %v500
      %566 = vmatprep.subr.bf16.mxu0 %v503
      %567 = vmatpush1.bf16.msra.mxu0 %v502
      %568 = vmatprep.subr.bf16.mxu0 %v505
      %569 = vmatpush1.bf16.msra.mxu0 %v504
      %570 = vmatprep.subr.bf16.mxu0 %v507
      %571 = vmatpush1.bf16.msra.mxu0 %v506
      %572 = vmatprep.subr.bf16.mxu0 %v509
      %573 = vmatpush1.bf16.msra.mxu0 %v508
      %574 = vmatprep.subr.bf16.mxu0 %v511
      %575 = vmatpush1.bf16.msra.mxu0 %v510
      %576 = vmatprep.subr.bf16.mxu0 %v513
      %577 = vmatpush1.bf16.msra.mxu0 %v512
      %578 = vmatprep.subr.bf16.mxu0 %v515
      %579 = vmatpush1.bf16.msra.mxu0 %v514
      %580 = vmatprep.subr.bf16.mxu0 %v517
      %581 = vmatpush1.bf16.msra.mxu0 %v516
      %582 = vmatprep.subr.bf16.mxu0 %v519
      %583 = vmatpush1.bf16.msra.mxu0 %v518
      %584 = vmatprep.subr.bf16.mxu0 %v521
      %585 = vmatpush1.bf16.msra.mxu0 %v520
      %586 = vmatprep.subr.bf16.mxu0 %v523
      %587 = vmatpush1.bf16.msra.mxu0 %v522
      %588 = vmatprep.mubr.bf16.mxu0 %v365
      %589 = vmatmul.mubr.bf16.gmra.mrb[0].mxu0 %v364
      %v590 = vpop.f32.mrb[0].mxu0
      %v591 = vadd.f32 0.0, %v590
      %v592 = vpop.f32.mrb[0].mxu0
      %v593 = vadd.f32 0.0, %v592
      %v594 = vpop.f32.mrb[0].mxu0
      %v595 = vadd.f32 0.0, %v594
      %v596 = vpop.f32.mrb[0].mxu0
      %v597 = vadd.f32 0.0, %v596
      %598 = vmatprep.mubr.bf16.mxu0 %v367
      %599 = vmatmul.mubr.bf16.gmra.mrb[0].mxu0 %v366
      %v600 = vpop.f32.mrb[0].mxu0
      %v601 = vadd.f32 0.0, %v600
      %v602 = vpop.f32.mrb[0].mxu0
      %v603 = vadd.f32 0.0, %v602
      %v604 = vpop.f32.mrb[0].mxu0
      %v605 = vadd.f32 0.0, %v604
      %v606 = vpop.f32.mrb[0].mxu0
      %v607 = vadd.f32 0.0, %v606
      %608 = vmatprep.mubr.bf16.mxu0 %v369
      %609 = vmatmul.mubr.bf16.gmra.mrb[0].mxu0 %v368
      %v610 = vpop.f32.mrb[0].mxu0
      %v611 = vadd.f32 0.0, %v610
      %v612 = vpop.f32.mrb[0].mxu0
      %v613 = vadd.f32 0.0, %v612
      %v614 = vpop.f32.mrb[0].mxu0
      %v615 = vadd.f32 0.0, %v614
      %v616 = vpop.f32.mrb[0].mxu0
      %v617 = vadd.f32 0.0, %v616
      %618 = vmatprep.mubr.bf16.mxu0 %v371
      %619 = vmatmul.mubr.bf16.gmra.mrb[0].mxu0 %v370
      %v620 = vpop.f32.mrb[0].mxu0
      %v621 = vadd.f32 0.0, %v620
      %v622 = vpop.f32.mrb[0].mxu0
      %v623 = vadd.f32 0.0, %v622
      %v624 = vpop.f32.mrb[0].mxu0
      %v625 = vadd.f32 0.0, %v624
      %v626 = vpop.f32.mrb[0].mxu0
      %v627 = vadd.f32 0.0, %v626
      %628 = vmatprep.mubr.bf16.mxu0 %v373
      %629 = vmatmul.mubr.bf16.gmra.mrb[0].mxu0 %v372
      %v630 = vpop.f32.mrb[0].mxu0
      %v631 = vadd.f32 0.0, %v630
      %v632 = vpop.f32.mrb[0].mxu0
      %v633 = vadd.f32 0.0, %v632
      %v634 = vpop.f32.mrb[0].mxu0
      %v635 = vadd.f32 0.0, %v634
      %v636 = vpop.f32.mrb[0].mxu0
      %v637 = vadd.f32 0.0, %v636
      %638 = vmatprep.mubr.bf16.mxu0 %v375
      %639 = vmatmul.mubr.bf16.gmra.mrb[0].mxu0 %v374
      %v640 = vpop.f32.mrb[0].mxu0
      %v641 = vadd.f32 0.0, %v640
      %v642 = vpop.f32.mrb[0].mxu0
      %v643 = vadd.f32 0.0, %v642
      %v644 = vpop.f32.mrb[0].mxu0
      %v645 = vadd.f32 0.0, %v644
      %v646 = vpop.f32.mrb[0].mxu0
      %v647 = vadd.f32 0.0, %v646
      %648 = vmatprep.mubr.bf16.mxu0 %v377
      %649 = vmatmul.mubr.bf16.gmra.mrb[0].mxu0 %v376
      %v650 = vpop.f32.mrb[0].mxu0
      %v651 = vadd.f32 0.0, %v650
      %v652 = vpop.f32.mrb[0].mxu0
      %v653 = vadd.f32 0.0, %v652
      %v654 = vpop.f32.mrb[0].mxu0
      %v655 = vadd.f32 0.0, %v654
      %v656 = vpop.f32.mrb[0].mxu0
      %v657 = vadd.f32 0.0, %v656
      %658 = vmatprep.mubr.bf16.mxu0 %v379
      %659 = vmatmul.mubr.bf16.gmra.mrb[0].mxu0 %v378
      %v660 = vpop.f32.mrb[0].mxu0
      %v661 = vadd.f32 0.0, %v660
      %v662 = vpop.f32.mrb[0].mxu0
      %v663 = vadd.f32 0.0, %v662
      %v664 = vpop.f32.mrb[0].mxu0
      %v665 = vadd.f32 0.0, %v664
      %v666 = vpop.f32.mrb[0].mxu0
      %v667 = vadd.f32 0.0, %v666
      %668 = vdwg.mxu0
      %v669 = vxor.u32 %v591, 2147483648
      %v670 = vxor.u32 %v595, 2147483648
      %v671 = vxor.u32 %v601, 2147483648
      %v672 = vxor.u32 %v605, 2147483648
      %v673 = vxor.u32 %v611, 2147483648
      %v674 = vxor.u32 %v615, 2147483648
      %v675 = vxor.u32 %v621, 2147483648
      %v676 = vxor.u32 %v625, 2147483648
      %v677 = vxor.u32 %v631, 2147483648
      %v678 = vxor.u32 %v635, 2147483648
      %v679 = vxor.u32 %v641, 2147483648
      %v680 = vxor.u32 %v645, 2147483648
      %v681 = vxor.u32 %v651, 2147483648
      %v682 = vxor.u32 %v655, 2147483648
      %v683 = vxor.u32 %v661, 2147483648
      %v684 = vxor.u32 %v665, 2147483648
      %v685 = vmul.f32 %v669, 1.442695
      %v686 = vpow.pop %v685
      %v687 = vmul.f32 %v670, 1.442695
      %v688 = vpow.pop %v687
      %v689 = vmul.f32 %v671, 1.442695
      %v690 = vpow.pop %v689
      %v691 = vmul.f32 %v672, 1.442695
      %v692 = vpow.pop %v691
      %v693 = vmul.f32 %v673, 1.442695
      %v694 = vpow.pop %v693
      %v695 = vmul.f32 %v674, 1.442695
      %v696 = vpow.pop %v695
      %v697 = vmul.f32 %v675, 1.442695
      %v698 = vpow.pop %v697
      %v699 = vmul.f32 %v676, 1.442695
      %v700 = vpow.pop %v699
      %v701 = vmul.f32 %v677, 1.442695
      %v702 = vpow.pop %v701
      %v703 = vmul.f32 %v678, 1.442695
      %v704 = vpow.pop %v703
      %v705 = vmul.f32 %v679, 1.442695
      %v706 = vpow.pop %v705
      %v707 = vmul.f32 %v680, 1.442695
      %v708 = vpow.pop %v707
      %v709 = vmul.f32 %v681, 1.442695
      %v710 = vpow.pop %v709
      %v711 = vmul.f32 %v682, 1.442695
      %v712 = vpow.pop %v711
      %v713 = vmul.f32 %v683, 1.442695
      %v714 = vpow.pop %v713
      %v715 = vmul.f32 %v684, 1.442695
      %v716 = vpow.pop %v715
      %v717 = vadd.f32 %v686, 1.0
      %v718 = vadd.f32 %v688, 1.0
      %v719 = vadd.f32 %v690, 1.0
      %v720 = vadd.f32 %v692, 1.0
      %v721 = vadd.f32 %v694, 1.0
      %v722 = vadd.f32 %v696, 1.0
      %v723 = vadd.f32 %v698, 1.0
      %v724 = vadd.f32 %v700, 1.0
      %v725 = vadd.f32 %v702, 1.0
      %v726 = vadd.f32 %v704, 1.0
      %v727 = vadd.f32 %v706, 1.0
      %v728 = vadd.f32 %v708, 1.0
      %v729 = vadd.f32 %v710, 1.0
      %v730 = vadd.f32 %v712, 1.0
      %v731 = vadd.f32 %v714, 1.0
      %v732 = vadd.f32 %v716, 1.0
      %v733 = vrcp.pop %v717
      %v734 = vmul.f32 1.0, %v733
      %v735 = vrcp.pop %v718
      %v736 = vmul.f32 1.0, %v735
      %v737 = vrcp.pop %v719
      %v738 = vmul.f32 1.0, %v737
      %v739 = vrcp.pop %v720
      %v740 = vmul.f32 1.0, %v739
      %v741 = vrcp.pop %v721
      %v742 = vmul.f32 1.0, %v741
      %v743 = vrcp.pop %v722
      %v744 = vmul.f32 1.0, %v743
      %v745 = vrcp.pop %v723
      %v746 = vmul.f32 1.0, %v745
      %v747 = vrcp.pop %v724
      %v748 = vmul.f32 1.0, %v747
      %v749 = vrcp.pop %v725
      %v750 = vmul.f32 1.0, %v749
      %v751 = vrcp.pop %v726
      %v752 = vmul.f32 1.0, %v751
      %v753 = vrcp.pop %v727
      %v754 = vmul.f32 1.0, %v753
      %v755 = vrcp.pop %v728
      %v756 = vmul.f32 1.0, %v755
      %v757 = vrcp.pop %v729
      %v758 = vmul.f32 1.0, %v757
      %v759 = vrcp.pop %v730
      %v760 = vmul.f32 1.0, %v759
      %v761 = vrcp.pop %v731
      %v762 = vmul.f32 1.0, %v761
      %v763 = vrcp.pop %v732
      %v764 = vmul.f32 1.0, %v763
      %v765 = vmul.f32 %v591, %v734
      %v766 = vmul.f32 %v595, %v736
      %v767 = vmul.f32 %v601, %v738
      %v768 = vmul.f32 %v605, %v740
      %v769 = vmul.f32 %v611, %v742
      %v770 = vmul.f32 %v615, %v744
      %v771 = vmul.f32 %v621, %v746
      %v772 = vmul.f32 %v625, %v748
      %v773 = vmul.f32 %v631, %v750
      %v774 = vmul.f32 %v635, %v752
      %v775 = vmul.f32 %v641, %v754
      %v776 = vmul.f32 %v645, %v756
      %v777 = vmul.f32 %v651, %v758
      %v778 = vmul.f32 %v655, %v760
      %v779 = vmul.f32 %v661, %v762
      %v780 = vmul.f32 %v665, %v764
      %v781 = vmul.f32 %v765, %v593
      %v782 = vmul.f32 %v766, %v597
      %v783 = vmul.f32 %v767, %v603
      %v784 = vmul.f32 %v768, %v607
      %v785 = vmul.f32 %v769, %v613
      %v786 = vmul.f32 %v770, %v617
      %v787 = vmul.f32 %v771, %v623
      %v788 = vmul.f32 %v772, %v627
      %v789 = vmul.f32 %v773, %v633
      %v790 = vmul.f32 %v774, %v637
      %v791 = vmul.f32 %v775, %v643
      %v792 = vmul.f32 %v776, %v647
      %v793 = vmul.f32 %v777, %v653
      %v794 = vmul.f32 %v778, %v657
      %v795 = vmul.f32 %v779, %v663
      %v796 = vmul.f32 %v780, %v667
      %v797 = vld [vmem:[#allocation2] sm:$0xff]
      %v798 = vld [vmem:[#allocation2 + $0x8] sm:$0xff]
      %v799 = vld [vmem:[#allocation2 + $0x10] sm:$0xff]
      %v800 = vld [vmem:[#allocation2 + $0x18] sm:$0xff]
      %v801 = vld [vmem:[#allocation2 + $0x20] sm:$0xff]
      %v802 = vld [vmem:[#allocation2 + $0x28] sm:$0xff]
      %v803 = vld [vmem:[#allocation2 + $0x30] sm:$0xff]
      %v804 = vld [vmem:[#allocation2 + $0x38] sm:$0xff]
      %v805 = vld [vmem:[#allocation2 + $0x40] sm:$0xff]
      %v806 = vld [vmem:[#allocation2 + $0x48] sm:$0xff]
      %v807 = vld [vmem:[#allocation2 + $0x50] sm:$0xff]
      %v808 = vld [vmem:[#allocation2 + $0x58] sm:$0xff]
      %v809 = vld [vmem:[#allocation2 + $0x60] sm:$0xff]
      %v810 = vld [vmem:[#allocation2 + $0x68] sm:$0xff]
      %v811 = vld [vmem:[#allocation2 + $0x70] sm:$0xff]
      %v812 = vld [vmem:[#allocation2 + $0x78] sm:$0xff]
      %v813 = vld [vmem:[#allocation2 + $0x80] sm:$0xff]
      %v814 = vld [vmem:[#allocation2 + $0x88] sm:$0xff]
      %v815 = vld [vmem:[#allocation2 + $0x90] sm:$0xff]
      %v816 = vld [vmem:[#allocation2 + $0x98] sm:$0xff]
      %v817 = vld [vmem:[#allocation2 + $0xa0] sm:$0xff]
      %v818 = vld [vmem:[#allocation2 + $0xa8] sm:$0xff]
      %v819 = vld [vmem:[#allocation2 + $0xb0] sm:$0xff]
      %v820 = vld [vmem:[#allocation2 + $0xb8] sm:$0xff]
      %v821 = vld [vmem:[#allocation2 + $0xc0] sm:$0xff]
      %v822 = vld [vmem:[#allocation2 + $0xc8] sm:$0xff]
      %v823 = vld [vmem:[#allocation2 + $0xd0] sm:$0xff]
      %v824 = vld [vmem:[#allocation2 + $0xd8] sm:$0xff]
      %v825 = vld [vmem:[#allocation2 + $0xe0] sm:$0xff]
      %v826 = vld [vmem:[#allocation2 + $0xe8] sm:$0xff]
      %v827 = vld [vmem:[#allocation2 + $0xf0] sm:$0xff]
      %v828 = vld [vmem:[#allocation2 + $0xf8] sm:$0xff]
      %v829 = vpack.c.bf16 %v782, %v781
      %v830 = vpack.c.bf16 %v784, %v783
      %v831 = vpack.c.bf16 %v786, %v785
      %v832 = vpack.c.bf16 %v788, %v787
      %v833 = vpack.c.bf16 %v790, %v789
      %v834 = vpack.c.bf16 %v792, %v791
      %v835 = vpack.c.bf16 %v794, %v793
      %v836 = vpack.c.bf16 %v796, %v795
      %v837 = vld [vmem:[%s223] sm:$0xff]
      %v838 = vld [vmem:[%s223 + $0x8] sm:$0xff]
      %v839 = vld [vmem:[%s223 + $0x10] sm:$0xff]
      %v840 = vld [vmem:[%s223 + $0x18] sm:$0xff]
      %v841 = vld [vmem:[%s223 + $0x20] sm:$0xff]
      %v842 = vld [vmem:[%s223 + $0x28] sm:$0xff]
      %v843 = vld [vmem:[%s223 + $0x30] sm:$0xff]
      %v844 = vld [vmem:[%s223 + $0x38] sm:$0xff]
      %v845 = vld [vmem:[%s223 + $0x40] sm:$0xff]
      %v846 = vld [vmem:[%s223 + $0x48] sm:$0xff]
      %v847 = vld [vmem:[%s223 + $0x50] sm:$0xff]
      %v848 = vld [vmem:[%s223 + $0x58] sm:$0xff]
      %v849 = vld [vmem:[%s223 + $0x60] sm:$0xff]
      %v850 = vld [vmem:[%s223 + $0x68] sm:$0xff]
      %v851 = vld [vmem:[%s223 + $0x70] sm:$0xff]
      %v852 = vld [vmem:[%s223 + $0x78] sm:$0xff]
      %v869 = vunpack.c.l.b16 %v837
      %v870 = vunpack.c.h.b16 %v837
      %v871 = vunpack.c.l.b16 %v838
      %v872 = vunpack.c.h.b16 %v838
      %v873 = vunpack.c.l.b16 %v839
      %v874 = vunpack.c.h.b16 %v839
      %v875 = vunpack.c.l.b16 %v840
      %v876 = vunpack.c.h.b16 %v840
      %v877 = vunpack.c.l.b16 %v841
      %v878 = vunpack.c.h.b16 %v841
      %v879 = vunpack.c.l.b16 %v842
      %v880 = vunpack.c.h.b16 %v842
      %v881 = vunpack.c.l.b16 %v843
      %v882 = vunpack.c.h.b16 %v843
      %v883 = vunpack.c.l.b16 %v844
      %v884 = vunpack.c.h.b16 %v844
      %v885 = vunpack.c.l.b16 %v845
      %v886 = vunpack.c.h.b16 %v845
      %v887 = vunpack.c.l.b16 %v846
      %v888 = vunpack.c.h.b16 %v846
      %v889 = vunpack.c.l.b16 %v847
      %v890 = vunpack.c.h.b16 %v847
      %v891 = vunpack.c.l.b16 %v848
      %v892 = vunpack.c.h.b16 %v848
      %v893 = vunpack.c.l.b16 %v849
      %v894 = vunpack.c.h.b16 %v849
      %v895 = vunpack.c.l.b16 %v850
      %v896 = vunpack.c.h.b16 %v850
      %v897 = vunpack.c.l.b16 %v851
      %v898 = vunpack.c.h.b16 %v851
      %v899 = vunpack.c.l.b16 %v852
      %v900 = vunpack.c.h.b16 %v852
      %v901 = vpack.c.b16 %v871, %v869
      %v902 = vpack.c.b16 %v872, %v870
      %v903 = vpack.c.b16 %v875, %v873
      %v904 = vpack.c.b16 %v876, %v874
      %v905 = vpack.c.b16 %v879, %v877
      %v906 = vpack.c.b16 %v880, %v878
      %v907 = vpack.c.b16 %v883, %v881
      %v908 = vpack.c.b16 %v884, %v882
      %v909 = vpack.c.b16 %v887, %v885
      %v910 = vpack.c.b16 %v888, %v886
      %v911 = vpack.c.b16 %v891, %v889
      %v912 = vpack.c.b16 %v892, %v890
      %v913 = vpack.c.b16 %v895, %v893
      %v914 = vpack.c.b16 %v896, %v894
      %v915 = vpack.c.b16 %v899, %v897
      %v916 = vpack.c.b16 %v900, %v898
      %933 = vmatprep.subr.bf16.mxu0 %v902
      %934 = vmatpush1.bf16.msra.mxu0 %v901
      %935 = vmatprep.subr.bf16.mxu0 %v904
      %936 = vmatpush1.bf16.msra.mxu0 %v903
      %937 = vmatprep.subr.bf16.mxu0 %v906
      %938 = vmatpush1.bf16.msra.mxu0 %v905
      %939 = vmatprep.subr.bf16.mxu0 %v908
      %940 = vmatpush1.bf16.msra.mxu0 %v907
      %941 = vmatprep.subr.bf16.mxu0 %v910
      %942 = vmatpush1.bf16.msra.mxu0 %v909
      %943 = vmatprep.subr.bf16.mxu0 %v912
      %944 = vmatpush1.bf16.msra.mxu0 %v911
      %945 = vmatprep.subr.bf16.mxu0 %v914
      %946 = vmatpush1.bf16.msra.mxu0 %v913
      %947 = vmatprep.subr.bf16.mxu0 %v916
      %948 = vmatpush1.bf16.msra.mxu0 %v915
      %949 = vmatprep.subr.bf16.mxu0 0
      %950 = vmatpush1.bf16.msra.mxu0 0
      %951 = vmatprep.subr.bf16.mxu0 0
      %952 = vmatpush1.bf16.msra.mxu0 0
      %953 = vmatprep.subr.bf16.mxu0 0
      %954 = vmatpush1.bf16.msra.mxu0 0
      %955 = vmatprep.subr.bf16.mxu0 0
      %956 = vmatpush1.bf16.msra.mxu0 0
      %957 = vmatprep.subr.bf16.mxu0 0
      %958 = vmatpush1.bf16.msra.mxu0 0
      %959 = vmatprep.subr.bf16.mxu0 0
      %960 = vmatpush1.bf16.msra.mxu0 0
      %961 = vmatprep.subr.bf16.mxu0 0
      %962 = vmatpush1.bf16.msra.mxu0 0
      %963 = vmatprep.subr.bf16.mxu0 0
      %964 = vmatpush1.bf16.msra.mxu0 0
      %965 = vmatprep.mubr.bf16.mxu0 0
      %966 = vmatmul.mubr.bf16.gmra.mrb[0].mxu0 %v829
      %v967 = vpop.f32.mrb[0].mxu0
      %v968 = vadd.f32 0.0, %v967
      %v969 = vpop.f32.mrb[0].mxu0
      %v970 = vadd.f32 0.0, %v969
      %v971 = vpop.f32.mrb[0].mxu0
      %v972 = vadd.f32 0.0, %v971
      %v973 = vpop.f32.mrb[0].mxu0
      %v974 = vadd.f32 0.0, %v973
      %975 = vmatprep.mubr.bf16.mxu0 0
      %976 = vmatmul.mubr.bf16.gmra.mrb[0].mxu0 %v830
      %v977 = vpop.f32.mrb[0].mxu0
      %v978 = vadd.f32 0.0, %v977
      %v979 = vpop.f32.mrb[0].mxu0
      %v980 = vadd.f32 0.0, %v979
      %v981 = vpop.f32.mrb[0].mxu0
      %v982 = vadd.f32 0.0, %v981
      %v983 = vpop.f32.mrb[0].mxu0
      %v984 = vadd.f32 0.0, %v983
      %985 = vmatprep.mubr.bf16.mxu0 0
      %986 = vmatmul.mubr.bf16.gmra.mrb[0].mxu0 %v831
      %v987 = vpop.f32.mrb[0].mxu0
      %v988 = vadd.f32 0.0, %v987
      %v989 = vpop.f32.mrb[0].mxu0
      %v990 = vadd.f32 0.0, %v989
      %v991 = vpop.f32.mrb[0].mxu0
      %v992 = vadd.f32 0.0, %v991
      %v993 = vpop.f32.mrb[0].mxu0
      %v994 = vadd.f32 0.0, %v993
      %995 = vmatprep.mubr.bf16.mxu0 0
      %996 = vmatmul.mubr.bf16.gmra.mrb[0].mxu0 %v832
      %v997 = vpop.f32.mrb[0].mxu0
      %v998 = vadd.f32 0.0, %v997
      %v999 = vpop.f32.mrb[0].mxu0
      %v1000 = vadd.f32 0.0, %v999
      %v1001 = vpop.f32.mrb[0].mxu0
      %v1002 = vadd.f32 0.0, %v1001
      %v1003 = vpop.f32.mrb[0].mxu0
      %v1004 = vadd.f32 0.0, %v1003
      %1005 = vmatprep.mubr.bf16.mxu0 0
      %1006 = vmatmul.mubr.bf16.gmra.mrb[0].mxu0 %v833
      %v1007 = vpop.f32.mrb[0].mxu0
      %v1008 = vadd.f32 0.0, %v1007
      %v1009 = vpop.f32.mrb[0].mxu0
      %v1010 = vadd.f32 0.0, %v1009
      %v1011 = vpop.f32.mrb[0].mxu0
      %v1012 = vadd.f32 0.0, %v1011
      %v1013 = vpop.f32.mrb[0].mxu0
      %v1014 = vadd.f32 0.0, %v1013
      %1015 = vmatprep.mubr.bf16.mxu0 0
      %1016 = vmatmul.mubr.bf16.gmra.mrb[0].mxu0 %v834
      %v1017 = vpop.f32.mrb[0].mxu0
      %v1018 = vadd.f32 0.0, %v1017
      %v1019 = vpop.f32.mrb[0].mxu0
      %v1020 = vadd.f32 0.0, %v1019
      %v1021 = vpop.f32.mrb[0].mxu0
      %v1022 = vadd.f32 0.0, %v1021
      %v1023 = vpop.f32.mrb[0].mxu0
      %v1024 = vadd.f32 0.0, %v1023
      %1025 = vmatprep.mubr.bf16.mxu0 0
      %1026 = vmatmul.mubr.bf16.gmra.mrb[0].mxu0 %v835
      %v1027 = vpop.f32.mrb[0].mxu0
      %v1028 = vadd.f32 0.0, %v1027
      %v1029 = vpop.f32.mrb[0].mxu0
      %v1030 = vadd.f32 0.0, %v1029
      %v1031 = vpop.f32.mrb[0].mxu0
      %v1032 = vadd.f32 0.0, %v1031
      %v1033 = vpop.f32.mrb[0].mxu0
      %v1034 = vadd.f32 0.0, %v1033
      %1035 = vmatprep.mubr.bf16.mxu0 0
      %1036 = vmatmul.mubr.bf16.gmra.mrb[0].mxu0 %v836
      %v1037 = vpop.f32.mrb[0].mxu0
      %v1038 = vadd.f32 0.0, %v1037
      %v1039 = vpop.f32.mrb[0].mxu0
      %v1040 = vadd.f32 0.0, %v1039
      %v1041 = vpop.f32.mrb[0].mxu0
      %v1042 = vadd.f32 0.0, %v1041
      %v1043 = vpop.f32.mrb[0].mxu0
      %v1044 = vadd.f32 0.0, %v1043
      %1045 = vdwg.mxu0
      %v1046 = vadd.f32 %v797, %v968
      %v1047 = vadd.f32 %v798, %v970
      %v1048 = vadd.f32 %v799, %v972
      %v1049 = vadd.f32 %v800, %v974
      %v1050 = vadd.f32 %v801, %v978
      %v1051 = vadd.f32 %v802, %v980
      %v1052 = vadd.f32 %v803, %v982
      %v1053 = vadd.f32 %v804, %v984
      %v1054 = vadd.f32 %v805, %v988
      %v1055 = vadd.f32 %v806, %v990
      %v1056 = vadd.f32 %v807, %v992
      %v1057 = vadd.f32 %v808, %v994
      %v1058 = vadd.f32 %v809, %v998
      %v1059 = vadd.f32 %v810, %v1000
      %v1060 = vadd.f32 %v811, %v1002
      %v1061 = vadd.f32 %v812, %v1004
      %v1062 = vadd.f32 %v813, %v1008
      %v1063 = vadd.f32 %v814, %v1010
      %v1064 = vadd.f32 %v815, %v1012
      %v1065 = vadd.f32 %v816, %v1014
      %v1066 = vadd.f32 %v817, %v1018
      %v1067 = vadd.f32 %v818, %v1020
      %v1068 = vadd.f32 %v819, %v1022
      %v1069 = vadd.f32 %v820, %v1024
      %v1070 = vadd.f32 %v821, %v1028
      %v1071 = vadd.f32 %v822, %v1030
      %v1072 = vadd.f32 %v823, %v1032
      %v1073 = vadd.f32 %v824, %v1034
      %v1074 = vadd.f32 %v825, %v1038
      %v1075 = vadd.f32 %v826, %v1040
      %v1076 = vadd.f32 %v827, %v1042
      %v1077 = vadd.f32 %v828, %v1044
      %1078 = vst [vmem:[#allocation2] sm:$0xff] %v1046
      %1079 = vst [vmem:[#allocation2 + $0x8] sm:$0xff] %v1047
      %1080 = vst [vmem:[#allocation2 + $0x10] sm:$0xff] %v1048
      %1081 = vst [vmem:[#allocation2 + $0x18] sm:$0xff] %v1049
      %1082 = vst [vmem:[#allocation2 + $0x20] sm:$0xff] %v1050
      %1083 = vst [vmem:[#allocation2 + $0x28] sm:$0xff] %v1051
      %1084 = vst [vmem:[#allocation2 + $0x30] sm:$0xff] %v1052
      %1085 = vst [vmem:[#allocation2 + $0x38] sm:$0xff] %v1053
      %1086 = vst [vmem:[#allocation2 + $0x40] sm:$0xff] %v1054
      %1087 = vst [vmem:[#allocation2 + $0x48] sm:$0xff] %v1055
      %1088 = vst [vmem:[#allocation2 + $0x50] sm:$0xff] %v1056
      %1089 = vst [vmem:[#allocation2 + $0x58] sm:$0xff] %v1057
      %1090 = vst [vmem:[#allocation2 + $0x60] sm:$0xff] %v1058
      %1091 = vst [vmem:[#allocation2 + $0x68] sm:$0xff] %v1059
      %1092 = vst [vmem:[#allocation2 + $0x70] sm:$0xff] %v1060
      %1093 = vst [vmem:[#allocation2 + $0x78] sm:$0xff] %v1061
      %1094 = vst [vmem:[#allocation2 + $0x80] sm:$0xff] %v1062
      %1095 = vst [vmem:[#allocation2 + $0x88] sm:$0xff] %v1063
      %1096 = vst [vmem:[#allocation2 + $0x90] sm:$0xff] %v1064
      %1097 = vst [vmem:[#allocation2 + $0x98] sm:$0xff] %v1065
      %1098 = vst [vmem:[#allocation2 + $0xa0] sm:$0xff] %v1066
      %1099 = vst [vmem:[#allocation2 + $0xa8] sm:$0xff] %v1067
      %1100 = vst [vmem:[#allocation2 + $0xb0] sm:$0xff] %v1068
      %1101 = vst [vmem:[#allocation2 + $0xb8] sm:$0xff] %v1069
      %1102 = vst [vmem:[#allocation2 + $0xc0] sm:$0xff] %v1070
      %1103 = vst [vmem:[#allocation2 + $0xc8] sm:$0xff] %v1071
      %1104 = vst [vmem:[#allocation2 + $0xd0] sm:$0xff] %v1072
      %1105 = vst [vmem:[#allocation2 + $0xd8] sm:$0xff] %v1073
      %1106 = vst [vmem:[#allocation2 + $0xe0] sm:$0xff] %v1074
      %1107 = vst [vmem:[#allocation2 + $0xe8] sm:$0xff] %v1075
      %1108 = vst [vmem:[#allocation2 + $0xf0] sm:$0xff] %v1076
      %1109 = vst [vmem:[#allocation2 + $0xf8] sm:$0xff] %v1077
      %p1110 = scmp.eq.s32.totalorder %s19, 3
      // Predicated region
      $region37: #{mixtral_mlp.1} parent=31 // pred_check
        %p1111 = pneg %p1110
      $region38: #{mixtral_mlp.1} parent=31 // pred_check_branch
        %1113 = sbr.rel (%p1111) target = $region40
      $region39: #{mixtral_mlp.1} parent=31 // pred_region
        %v1114 = vld [vmem:[#allocation2] sm:$0xff]
        %v1115 = vld [vmem:[#allocation2 + $0x8] sm:$0xff]
        %v1116 = vld [vmem:[#allocation2 + $0x10] sm:$0xff]
        %v1117 = vld [vmem:[#allocation2 + $0x18] sm:$0xff]
        %v1118 = vld [vmem:[#allocation2 + $0x20] sm:$0xff]
        %v1119 = vld [vmem:[#allocation2 + $0x28] sm:$0xff]
        %v1120 = vld [vmem:[#allocation2 + $0x30] sm:$0xff]
        %v1121 = vld [vmem:[#allocation2 + $0x38] sm:$0xff]
        %v1122 = vld [vmem:[#allocation2 + $0x40] sm:$0xff]
        %v1123 = vld [vmem:[#allocation2 + $0x48] sm:$0xff]
        %v1124 = vld [vmem:[#allocation2 + $0x50] sm:$0xff]
        %v1125 = vld [vmem:[#allocation2 + $0x58] sm:$0xff]
        %v1126 = vld [vmem:[#allocation2 + $0x60] sm:$0xff]
        %v1127 = vld [vmem:[#allocation2 + $0x68] sm:$0xff]
        %v1128 = vld [vmem:[#allocation2 + $0x70] sm:$0xff]
        %v1129 = vld [vmem:[#allocation2 + $0x78] sm:$0xff]
        %v1130 = vld [vmem:[#allocation2 + $0x80] sm:$0xff]
        %v1131 = vld [vmem:[#allocation2 + $0x88] sm:$0xff]
        %v1132 = vld [vmem:[#allocation2 + $0x90] sm:$0xff]
        %v1133 = vld [vmem:[#allocation2 + $0x98] sm:$0xff]
        %v1134 = vld [vmem:[#allocation2 + $0xa0] sm:$0xff]
        %v1135 = vld [vmem:[#allocation2 + $0xa8] sm:$0xff]
        %v1136 = vld [vmem:[#allocation2 + $0xb0] sm:$0xff]
        %v1137 = vld [vmem:[#allocation2 + $0xb8] sm:$0xff]
        %v1138 = vld [vmem:[#allocation2 + $0xc0] sm:$0xff]
        %v1139 = vld [vmem:[#allocation2 + $0xc8] sm:$0xff]
        %v1140 = vld [vmem:[#allocation2 + $0xd0] sm:$0xff]
        %v1141 = vld [vmem:[#allocation2 + $0xd8] sm:$0xff]
        %v1142 = vld [vmem:[#allocation2 + $0xe0] sm:$0xff]
        %v1143 = vld [vmem:[#allocation2 + $0xe8] sm:$0xff]
        %v1144 = vld [vmem:[#allocation2 + $0xf0] sm:$0xff]
        %v1145 = vld [vmem:[#allocation2 + $0xf8] sm:$0xff]
        %v1146 = vpack.c.bf16 %v1116, %v1114
        %v1147 = vpack.c.bf16 %v1117, %v1115
        %v1148 = vpack.c.bf16 %v1120, %v1118
        %v1149 = vpack.c.bf16 %v1121, %v1119
        %v1150 = vpack.c.bf16 %v1124, %v1122
        %v1151 = vpack.c.bf16 %v1125, %v1123
        %v1152 = vpack.c.bf16 %v1128, %v1126
        %v1153 = vpack.c.bf16 %v1129, %v1127
        %v1154 = vpack.c.bf16 %v1132, %v1130
        %v1155 = vpack.c.bf16 %v1133, %v1131
        %v1156 = vpack.c.bf16 %v1136, %v1134
        %v1157 = vpack.c.bf16 %v1137, %v1135
        %v1158 = vpack.c.bf16 %v1140, %v1138
        %v1159 = vpack.c.bf16 %v1141, %v1139
        %v1160 = vpack.c.bf16 %v1144, %v1142
        %v1161 = vpack.c.bf16 %v1145, %v1143
        %v1178 = vunpack.c.l.b16 %v1146
        %v1179 = vunpack.c.l.b16 %v1147
        %v1180 = vunpack.c.h.b16 %v1146
        %v1181 = vunpack.c.h.b16 %v1147
        %v1182 = vunpack.c.l.b16 %v1148
        %v1183 = vunpack.c.l.b16 %v1149
        %v1184 = vunpack.c.h.b16 %v1148
        %v1185 = vunpack.c.h.b16 %v1149
        %v1186 = vunpack.c.l.b16 %v1150
        %v1187 = vunpack.c.l.b16 %v1151
        %v1188 = vunpack.c.h.b16 %v1150
        %v1189 = vunpack.c.h.b16 %v1151
        %v1190 = vunpack.c.l.b16 %v1152
        %v1191 = vunpack.c.l.b16 %v1153
        %v1192 = vunpack.c.h.b16 %v1152
        %v1193 = vunpack.c.h.b16 %v1153
        %v1194 = vunpack.c.l.b16 %v1154
        %v1195 = vunpack.c.l.b16 %v1155
        %v1196 = vunpack.c.h.b16 %v1154
        %v1197 = vunpack.c.h.b16 %v1155
        %v1198 = vunpack.c.l.b16 %v1156
        %v1199 = vunpack.c.l.b16 %v1157
        %v1200 = vunpack.c.h.b16 %v1156
        %v1201 = vunpack.c.h.b16 %v1157
        %v1202 = vunpack.c.l.b16 %v1158
        %v1203 = vunpack.c.l.b16 %v1159
        %v1204 = vunpack.c.h.b16 %v1158
        %v1205 = vunpack.c.h.b16 %v1159
        %v1206 = vunpack.c.l.b16 %v1160
        %v1207 = vunpack.c.l.b16 %v1161
        %v1208 = vunpack.c.h.b16 %v1160
        %v1209 = vunpack.c.h.b16 %v1161
        %v1210 = vpack.c.b16 %v1179, %v1178
        %v1211 = vpack.c.b16 %v1181, %v1180
        %v1212 = vpack.c.b16 %v1183, %v1182
        %v1213 = vpack.c.b16 %v1185, %v1184
        %v1214 = vpack.c.b16 %v1187, %v1186
        %v1215 = vpack.c.b16 %v1189, %v1188
        %v1216 = vpack.c.b16 %v1191, %v1190
        %v1217 = vpack.c.b16 %v1193, %v1192
        %v1218 = vpack.c.b16 %v1195, %v1194
        %v1219 = vpack.c.b16 %v1197, %v1196
        %v1220 = vpack.c.b16 %v1199, %v1198
        %v1221 = vpack.c.b16 %v1201, %v1200
        %v1222 = vpack.c.b16 %v1203, %v1202
        %v1223 = vpack.c.b16 %v1205, %v1204
        %v1224 = vpack.c.b16 %v1207, %v1206
        %v1225 = vpack.c.b16 %v1209, %v1208
        %1242 = vst [vmem:[%s229] sm:$0xff] %v1210
        %1243 = vst [vmem:[%s229 + $0x8] sm:$0xff] %v1211
        %1244 = vst [vmem:[%s229 + $0x10] sm:$0xff] %v1212
        %1245 = vst [vmem:[%s229 + $0x18] sm:$0xff] %v1213
        %1246 = vst [vmem:[%s229 + $0x20] sm:$0xff] %v1214
        %1247 = vst [vmem:[%s229 + $0x28] sm:$0xff] %v1215
        %1248 = vst [vmem:[%s229 + $0x30] sm:$0xff] %v1216
        %1249 = vst [vmem:[%s229 + $0x38] sm:$0xff] %v1217
        %1250 = vst [vmem:[%s229 + $0x40] sm:$0xff] %v1218
        %1251 = vst [vmem:[%s229 + $0x48] sm:$0xff] %v1219
        %1252 = vst [vmem:[%s229 + $0x50] sm:$0xff] %v1220
        %1253 = vst [vmem:[%s229 + $0x58] sm:$0xff] %v1221
        %1254 = vst [vmem:[%s229 + $0x60] sm:$0xff] %v1222
        %1255 = vst [vmem:[%s229 + $0x68] sm:$0xff] %v1223
        %1256 = vst [vmem:[%s229 + $0x70] sm:$0xff] %v1224
        %1257 = vst [vmem:[%s229 + $0x78] sm:$0xff] %v1225
      $region40: #{mixtral_mlp.1} parent=31 // pred_fallthru
        _
      %s1258 = smul.u32 16, %s18
      %p1259 = scmp.lt.s32.totalorder %s1258, 31
      %s1260 = scalar_select %p1259, %s1258, 31
      %s1261 = smul.addr %s1260, 2
      %s1262 = smul.addr %s1261, 4
      %s1263 = scalar_lea.vmem %s3, %s1262
      // Predicated region
      $region41: #{mixtral_mlp.1} parent=31 // pred_check
        %p1264 = pneg %p122
      $region42: #{mixtral_mlp.1} parent=31 // pred_check_branch
        %1266 = sbr.rel (%p1264) target = $region44
      $region43: #{mixtral_mlp.1} parent=31 // pred_region
        %s1267 = smul.u32 16, %s18
      $region44: #{mixtral_mlp.1} parent=31 // pred_fallthru
        _
    $region32: #{mixtral_mlp.1} parent=5 // pred_fallthru
      _
    %p1268 = scmp.le.s32.totalorder 2, %s9
    // Predicated region
    $region45: #{mixtral_mlp.1} parent=5 // pred_check
      %p1269 = pneg %p1268
    $region46: #{mixtral_mlp.1} parent=5 // pred_check_branch
      %1271 = sbr.rel (%p1269) target = $region48
    $region47: #{mixtral_mlp.1} parent=5 // pred_region
      %s1272 = ssub.s32 %s9, 2
      // Predicated region
      $region49: #{mixtral_mlp.1} parent=47 // pred_check
        %p1273 = pneg %p128
      $region50: #{mixtral_mlp.1} parent=47 // pred_check_branch
        %1275 = sbr.rel (%p1273) target = $region52
      $region51: #{mixtral_mlp.1} parent=47 // pred_region
        %s1276 = smul.u32 16, %s20
        %p1277 = scmp.lt.s32.totalorder %s1276, 31
        %s1278 = scalar_select %p1277, %s1276, 31
        %s1279 = smul.addr %s1278, 2
        %s1280 = smul.addr %s1279, 4
        %s1281 = scalar_lea.vmem %s3, %s1280
      $region52: #{mixtral_mlp.1} parent=47 // pred_fallthru
        _
    $region48: #{mixtral_mlp.1} parent=5 // pred_fallthru
      _
  $region6: #{mixtral_mlp.1} parent=0 // loop_footer
    %s13 = sadd.s32 1, %s9
  $region7: #{mixtral_mlp.1} parent=0 // loop_footer_branch
    %8 = sbr.rel target = $region3
  $region8: #{mixtral_mlp.1} parent=0 // loop_exit
    _

</llo_original>
